<compile_context>
chip_gen: v7x
topology: tpu7x:2x2x1
jax: 0.10.0
libtpu: 0.0.40
codegen_flags: <defaults>
</compile_context>

<pallas_src>
import math

import jax
import jax.numpy as jnp
from jax.experimental import pallas as pl
from jax.experimental.pallas import tpu as pltpu

LAYER_NORM_EPS = 1e-12


def _round_up(x, m):
    return (x + m - 1) // m * m


def _lm_head_kernel(x_ref, w1_ref, pbg_ref, w2_ref, b2_ref, o_ref, h_ref):
    # ---- Stage 1: dense + GELU + LayerNorm, once per row tile ---------------
    # Correct only because the vocab axis is the innermost, sequentially
    # iterated ("arbitrary") grid axis: j == 0 is visited before j > 0 for
    # every row tile i.
    @pl.when(pl.program_id(1) == 0)
    def _():
        # [tm, H] @ [H, H]^T  (nn.Linear layout: contract dim 1 of both operands)
        y = jax.lax.dot_general(
            x_ref[...], w1_ref[...],
            dimension_numbers=(((1,), (1,)), ((), ())),
            preferred_element_type=jnp.float32)
        pbg = pbg_ref[...]                          # (3, H) f32: bias, gamma, beta
        y = y + pbg[0:1, :]
        # exact (erf) GELU, matching HF ACT2FN["gelu"]
        y = 0.5 * y * (1.0 + jax.lax.erf(y * (1.0 / math.sqrt(2.0))))
        mean = jnp.mean(y, axis=-1, keepdims=True)
        c = y - mean
        var = jnp.mean(c * c, axis=-1, keepdims=True)
        inv = jax.lax.rsqrt(var + LAYER_NORM_EPS)
        # Single downcast here; stage 2 reads h in model dtype every step.
        h_ref[...] = (c * inv * pbg[1:2, :] + pbg[2:3, :]).astype(h_ref.dtype)

    # ---- Stage 2: decoder tile  [tm, H] @ [tv, H]^T + bias ------------------
    logits = jax.lax.dot_general(
        h_ref[...], w2_ref[...],
        dimension_numbers=(((1,), (1,)), ((), ())),
        preferred_element_type=jnp.float32)
    logits = logits + b2_ref[...].astype(jnp.float32)
    o_ref[...] = logits.astype(o_ref.dtype)


def _pick_row_tile(M, tm_max=1024):
    """Row tile: big enough to amortize the W_dec stream, >=2 tiles when M
    is large enough (v7x megacore), tiny-M stays a single minimal tile."""
    m_unit = _round_up(M, 8)
    if m_unit <= 256:
        return m_unit                              # tiny: one tile, minimal pad
    tm = min(tm_max, _round_up(M, 256))
    # Ensure at least 2 row tiles when M permits (keeps both v7x TCs busy).
    while tm > 256 and _round_up(M, tm) < 2 * tm:
        tm //= 2
    return tm


def _vmem_estimate(tm, tv, H, x_isz, w1_isz, w2_isz, out_isz):
    return (2 * tm * H * x_isz          # x tile (double buffered)
            + 2 * H * H * w1_isz        # dense weight (resident)
            + 2 * 8 * H * 4             # packed bias/gamma/beta (padded sublanes)
            + 2 * tv * H * w2_isz       # decoder weight tile
            + 2 * 8 * tv * 4            # decoder bias tile
            + 2 * tm * tv * out_isz     # output tile
            + tm * H * x_isz)           # h scratch (model dtype)


def bert_lm_prediction_head(x, w_dense, b_dense, gamma, beta, w_dec, b_dec,
                            *, tm=None, tv=512, out_dtype=None):
    """x: [B, S, H]; w_dense: [H, H] (nn.Linear out x in); b_dense/gamma/beta: [H];
    w_dec: [V, H]; b_dec: [V].  Returns logits [B, S, V]."""
    B, S, H = x.shape
    V = w_dec.shape[0]
    M = B * S
    out_dtype = x.dtype if out_dtype is None else out_dtype

    if tm is None:
        tm = _pick_row_tile(M)
    tm = min(tm, _round_up(M, 8))
    tv = min(tv, _round_up(V, 128))
    m_pad = _round_up(M, tm)
    v_pad = _round_up(V, tv)

    x2 = x.reshape(M, H)
    if m_pad != M:
        x2 = jnp.pad(x2, ((0, m_pad - M), (0, 0)))
    w2, b2 = w_dec, b_dec
    if v_pad != V:
        w2 = jnp.pad(w2, ((0, v_pad - V), (0, 0)))
        b2 = jnp.pad(b2, ((0, v_pad - V),))
    b2 = b2.reshape(1, v_pad)

    # Pack dense bias + LN gamma/beta into one small resident f32 block.
    pbg = jnp.stack([b_dense, gamma, beta], axis=0).astype(jnp.float32)

    grid = (m_pad // tm, v_pad // tv)

    est = _vmem_estimate(
        tm, tv, H,
        jnp.dtype(x.dtype).itemsize, jnp.dtype(w_dense.dtype).itemsize,
        jnp.dtype(w2.dtype).itemsize, jnp.dtype(out_dtype).itemsize)
    vmem_limit = int(min(max(2 * est, 32 * 1024 * 1024), 48 * 1024 * 1024))

    out = pl.pallas_call(
        _lm_head_kernel,
        out_shape=jax.ShapeDtypeStruct((m_pad, v_pad), out_dtype),
        grid_spec=pltpu.PrefetchScalarGridSpec(
            num_scalar_prefetch=0,
            grid=grid,
            in_specs=[
                pl.BlockSpec((tm, H), lambda i, j: (i, 0)),   # x row tile
                pl.BlockSpec((H, H), lambda i, j: (0, 0)),    # dense W (resident)
                pl.BlockSpec((3, H), lambda i, j: (0, 0)),    # bias/gamma/beta
                pl.BlockSpec((tv, H), lambda i, j: (j, 0)),   # decoder W tile
                pl.BlockSpec((1, tv), lambda i, j: (0, j)),   # decoder bias tile
            ],
            out_specs=pl.BlockSpec((tm, tv), lambda i, j: (i, j)),
            # h scratch in MODEL dtype (not f32): halves scratch reads/footprint.
            scratch_shapes=[pltpu.VMEM((tm, H), x.dtype)],
        ),
        compiler_params=pltpu.CompilerParams(
            # Row axis parallel (megacore); vocab axis MUST stay arbitrary so
            # the h scratch filled at j == 0 is valid for all j > 0.
            dimension_semantics=("parallel", "arbitrary"),
            vmem_limit_bytes=vmem_limit,
        ),
    )(x2, w_dense, pbg, w2, b2)

    return out[:M, :V].reshape(B, S, V)


def _reference(x, w_dense, b_dense, gamma, beta, w_dec, b_dec):
    y = jnp.einsum("bsh,oh->bso", x, w_dense) + b_dense
    y = 0.5 * y * (1.0 + jax.lax.erf(y / jnp.sqrt(2.0)))
    mean = jnp.mean(y, axis=-1, keepdims=True)
    var = jnp.mean((y - mean) ** 2, axis=-1, keepdims=True)
    y = (y - mean) / jnp.sqrt(var + LAYER_NORM_EPS) * gamma + beta
    return jnp.einsum("bsh,vh->bsv", y, w_dec) + b_dec


if __name__ == "__main__":
    batch, seq, hidden, vocab = 2, 8, 32, 64

    key = jax.random.PRNGKey(0)
    k_x, k_w1, k_b1, k_w2, k_b2 = jax.random.split(key, 5)

    x = jax.random.normal(k_x, (batch, seq, hidden), dtype=jnp.float32)
    # transform.dense: nn.Linear(H, H) -> weight [out, in], bias [out]
    w_dense = jax.random.normal(k_w1, (hidden, hidden), dtype=jnp.float32) * 0.02
    b_dense = jax.random.normal(k_b1, (hidden,), dtype=jnp.float32) * 0.02
    # transform.LayerNorm default init
    gamma = jnp.ones((hidden,), dtype=jnp.float32)
    beta = jnp.zeros((hidden,), dtype=jnp.float32)
    # decoder: nn.Linear(H, V, bias=False) + tied bias Parameter [V]
    w_dec = jax.random.normal(k_w2, (vocab, hidden), dtype=jnp.float32) * 0.02
    b_dec = jax.random.normal(k_b2, (vocab,), dtype=jnp.float32) * 0.02

    out = bert_lm_prediction_head(x, w_dense, b_dense, gamma, beta, w_dec, b_dec)
    out = jax.block_until_ready(out)

    ref = _reference(x, w_dense, b_dense, gamma, beta, w_dec, b_dec)
    assert out.shape == (batch, seq, vocab)
    err = float(jnp.max(jnp.abs(out - ref)))
    assert err < 1e-3, f"mismatch vs reference: max abs err {err}"

    print("KERNEL_OK")
</pallas_src>

<mosaic_0001>
module attributes {stable_mosaic.version = 11 : i64} {
  func.func @_lm_head_kernel(%arg0: i32, %arg1: i32, %arg2: memref<16x32xf32, #tpu.memory_space<vmem>>, %arg3: memref<32x32xf32, #tpu.memory_space<vmem>>, %arg4: memref<3x32xf32, #tpu.memory_space<vmem>>, %arg5: memref<128x32xf32, #tpu.memory_space<vmem>>, %arg6: memref<1x128xf32, #tpu.memory_space<vmem>>, %arg7: memref<16x128xf32, #tpu.memory_space<vmem>>, %arg8: memref<16x32xf32, #tpu.memory_space<vmem>>) attributes {dimension_semantics = [#tpu.dimension_semantics<parallel>, #tpu.dimension_semantics<arbitrary>], iteration_bounds = array<i64: 1, 1>, scalar_prefetch = 0 : i64, scratch_operands = 1 : i64, tpu.core_type = #tpu.core_type<tc>, window_params = [{transform_indices = @transform_0, window_bounds = array<i64: 16, 32>}, {pipeline_mode = #tpu.pipeline_mode<synchronous>, transform_indices = @transform_1, window_bounds = array<i64: 32, 32>}, {pipeline_mode = #tpu.pipeline_mode<synchronous>, transform_indices = @transform_2, window_bounds = array<i64: 3, 32>}, {transform_indices = @transform_3, window_bounds = array<i64: 128, 32>}, {transform_indices = @transform_4, window_bounds = array<i64: 1, 128>}, {transform_indices = @transform_5, window_bounds = array<i64: 16, 128>}]} {
    %c0_i32 = arith.constant 0 : i32
    %0 = arith.cmpi eq, %arg1, %c0_i32 : i32
    %1 = arith.extui %0 : i1 to i32
    %c0_i32_0 = arith.constant 0 : i32
    %2 = arith.cmpi ne, %1, %c0_i32_0 : i32
    scf.if %2 {
      %c0_8 = arith.constant 0 : index
      %c0_9 = arith.constant 0 : index
      %10 = vector.load %arg2[%c0_8, %c0_9] : memref<16x32xf32, #tpu.memory_space<vmem>>, vector<16x32xf32>
      %c0_10 = arith.constant 0 : index
      %c0_11 = arith.constant 0 : index
      %11 = vector.load %arg3[%c0_10, %c0_11] : memref<32x32xf32, #tpu.memory_space<vmem>>, vector<32x32xf32>
      %cst_12 = arith.constant dense<0.000000e+00> : vector<16x32xf32>
      %12 = tpu.matmul %10, %11, %cst_12 {dimension_numbers = #tpu.dot_dimension_numbers<[1], [1], [0], [0], [0, 0, 1, 0], [], []>} : vector<16x32xf32>, vector<32x32xf32>, vector<16x32xf32> -> vector<16x32xf32>
      %c0_13 = arith.constant 0 : index
      %c0_14 = arith.constant 0 : index
      %13 = vector.load %arg4[%c0_13, %c0_14] : memref<3x32xf32, #tpu.memory_space<vmem>>, vector<3x32xf32>
      %14 = vector.extract_strided_slice %13 {offsets = [0, 0], sizes = [1, 32], strides = [1, 1]} : vector<3x32xf32> to vector<1x32xf32>
      %15 = vector.broadcast %14 : vector<1x32xf32> to vector<16x32xf32>
      %16 = arith.addf %12, %15 : vector<16x32xf32>
      %cst_15 = arith.constant 5.000000e-01 : f32
      %17 = vector.broadcast %cst_15 : f32 to vector<16x32xf32>
      %18 = arith.mulf %17, %16 : vector<16x32xf32>
      %cst_16 = arith.constant 0.707106769 : f32
      %19 = vector.broadcast %cst_16 : f32 to vector<16x32xf32>
      %20 = arith.mulf %16, %19 : vector<16x32xf32>
      %21 = math.erf %20 : vector<16x32xf32>
      %cst_17 = arith.constant 1.000000e+00 : f32
      %22 = vector.broadcast %cst_17 : f32 to vector<16x32xf32>
      %23 = arith.addf %22, %21 : vector<16x32xf32>
      %24 = arith.mulf %18, %23 : vector<16x32xf32>
      %cst_18 = arith.constant dense<0.000000e+00> : vector<16xf32>
      %25 = vector.multi_reduction <add>, %24, %cst_18 [1] : vector<16x32xf32> to vector<16xf32>
      %26 = vector.shape_cast %25 : vector<16xf32> to vector<16x1xf32>
      %cst_19 = arith.constant 3.200000e+01 : f32
      %27 = vector.broadcast %cst_19 : f32 to vector<16x1xf32>
      %28 = arith.divf %26, %27 : vector<16x1xf32>
      %29 = vector.broadcast %28 : vector<16x1xf32> to vector<16x32xf32>
      %30 = arith.subf %24, %29 : vector<16x32xf32>
      %31 = arith.mulf %30, %30 : vector<16x32xf32>
      %cst_20 = arith.constant dense<0.000000e+00> : vector<16xf32>
      %32 = vector.multi_reduction <add>, %31, %cst_20 [1] : vector<16x32xf32> to vector<16xf32>
      %33 = vector.shape_cast %32 : vector<16xf32> to vector<16x1xf32>
      %cst_21 = arith.constant 3.200000e+01 : f32
      %34 = vector.broadcast %cst_21 : f32 to vector<16x1xf32>
      %35 = arith.divf %33, %34 : vector<16x1xf32>
      %cst_22 = arith.constant 9.99999996E-13 : f32
      %36 = vector.broadcast %cst_22 : f32 to vector<16x1xf32>
      %37 = arith.addf %35, %36 : vector<16x1xf32>
      %38 = math.rsqrt %37 : vector<16x1xf32>
      %39 = vector.broadcast %38 : vector<16x1xf32> to vector<16x32xf32>
      %40 = arith.mulf %30, %39 : vector<16x32xf32>
      %41 = vector.extract_strided_slice %13 {offsets = [1, 0], sizes = [1, 32], strides = [1, 1]} : vector<3x32xf32> to vector<1x32xf32>
      %42 = vector.broadcast %41 : vector<1x32xf32> to vector<16x32xf32>
      %43 = arith.mulf %40, %42 : vector<16x32xf32>
      %44 = vector.extract_strided_slice %13 {offsets = [2, 0], sizes = [1, 32], strides = [1, 1]} : vector<3x32xf32> to vector<1x32xf32>
      %45 = vector.broadcast %44 : vector<1x32xf32> to vector<16x32xf32>
      %46 = arith.addf %43, %45 : vector<16x32xf32>
      %c0_23 = arith.constant 0 : index
      %c0_24 = arith.constant 0 : index
      %47 = vector.load %arg8[%c0_23, %c0_24] : memref<16x32xf32, #tpu.memory_space<vmem>>, vector<16x32xf32>
      tpu.vector_store %arg8[%c0_23, %c0_24], %46 {strides = array<i32>} : memref<16x32xf32, #tpu.memory_space<vmem>>, vector<16x32xf32>,
    } else {
    }
    %c0 = arith.constant 0 : index
    %c0_1 = arith.constant 0 : index
    %3 = vector.load %arg8[%c0, %c0_1] : memref<16x32xf32, #tpu.memory_space<vmem>>, vector<16x32xf32>
    %c0_2 = arith.constant 0 : index
    %c0_3 = arith.constant 0 : index
    %4 = vector.load %arg5[%c0_2, %c0_3] : memref<128x32xf32, #tpu.memory_space<vmem>>, vector<128x32xf32>
    %cst = arith.constant dense<0.000000e+00> : vector<16x128xf32>
    %5 = tpu.matmul %3, %4, %cst {dimension_numbers = #tpu.dot_dimension_numbers<[1], [1], [0], [0], [0, 0, 1, 0], [], []>} : vector<16x32xf32>, vector<128x32xf32>, vector<16x128xf32> -> vector<16x128xf32>
    %c0_4 = arith.constant 0 : index
    %c0_5 = arith.constant 0 : index
    %6 = vector.load %arg6[%c0_4, %c0_5] : memref<1x128xf32, #tpu.memory_space<vmem>>, vector<1x128xf32>
    %7 = vector.broadcast %6 : vector<1x128xf32> to vector<16x128xf32>
    %8 = arith.addf %5, %7 : vector<16x128xf32>
    %c0_6 = arith.constant 0 : index
    %c0_7 = arith.constant 0 : index
    %9 = vector.load %arg7[%c0_6, %c0_7] : memref<16x128xf32, #tpu.memory_space<vmem>>, vector<16x128xf32>
    tpu.vector_store %arg7[%c0_6, %c0_7], %8 {strides = array<i32>} : memref<16x128xf32, #tpu.memory_space<vmem>>, vector<16x128xf32>,
    return
  }
  func.func @transform_0(%arg0: i32, %arg1: i32) -> (i32, i32) {
    %c0_i32 = arith.constant 0 : i32
    %c0_i32_0 = arith.constant 0 : i32
    return %arg0, %c0_i32 : i32, i32
  }
  func.func @transform_1(%arg0: i32, %arg1: i32) -> (i32, i32) {
    %c0_i32 = arith.constant 0 : i32
    %c0_i32_0 = arith.constant 0 : i32
    %c0_i32_1 = arith.constant 0 : i32
    return %c0_i32, %c0_i32_0 : i32, i32
  }
  func.func @transform_2(%arg0: i32, %arg1: i32) -> (i32, i32) {
    %c0_i32 = arith.constant 0 : i32
    %c0_i32_0 = arith.constant 0 : i32
    %c0_i32_1 = arith.constant 0 : i32
    return %c0_i32, %c0_i32_0 : i32, i32
  }
  func.func @transform_3(%arg0: i32, %arg1: i32) -> (i32, i32) {
    %c0_i32 = arith.constant 0 : i32
    %c0_i32_0 = arith.constant 0 : i32
    return %arg1, %c0_i32 : i32, i32
  }
  func.func @transform_4(%arg0: i32, %arg1: i32) -> (i32, i32) {
    %c0_i32 = arith.constant 0 : i32
    %c0_i32_0 = arith.constant 0 : i32
    return %c0_i32, %arg1 : i32, i32
  }
  func.func @transform_5(%arg0: i32, %arg1: i32) -> (i32, i32) {
    %c0_i32 = arith.constant 0 : i32
    return %arg0, %arg1 : i32, i32
  }
}

</mosaic_0001>

<llo_original>
// kernel: tpu_custom_call.1
$region0: #{tpu_custom_call.1}
  #allocation0 [shape = 'u32[]', space=smem, size = 0x4, offset = 0x4, fixed_abs, tag = 'smem constant byte address 0x4 - core index']
  #allocation1 [shape = 'u32[144,128]{1,0:T(1,128)}', space=vmem, size = 0x12000, scoped, tag = 'internal scratch']
  #allocation2 [shape = 'f32[16,32]{1,0:T(8,128)}', space=vmem, size = 0x2000, scoped, tag = 'scratch operand']
  %s0 = inlined_call_operand.vmem [shape: f32[16,32], index: 0, kind: input, shape index: {}]
  %s1 = inlined_call_operand.vmem [shape: f32[32,32], index: 1, kind: input, shape index: {}]
  %s2 = inlined_call_operand.vmem [shape: f32[3,32], index: 2, kind: input, shape index: {}]
  %s3 = inlined_call_operand.vmem [shape: f32[128,32], index: 3, kind: input, shape index: {}]
  %s4 = inlined_call_operand.vmem [shape: f32[1,128], index: 4, kind: input, shape index: {}]
  %s5 = inlined_call_operand.hbm [shape: f32[16,128], index: 5, kind: output, shape index: {}]
  %s6 = sld [smem:[#allocation0]]
  $region34: #{tpu_custom_call.1} parent=0
    _
  %s8 = ssub.s32 1, %s6
  %s9 = scalar_select 0, %s8, %s6
  $region1: #{tpu_custom_call.1} parent=0
    #allocation3 [shape = 'u8[8192]{0}', space=vmem, size = 0x2000, scoped, tag = 'output window, operand 0, single buffered']
    #allocation4 [shape = 's32[1]{0}', space=sflag, size = 0x4, scoped, tag = 'scoped memory for tpu_custom_call.1']
    %10 = vsyncpa [#allocation4], 0
    // Predicated region
    $region2: #{tpu_custom_call.1} parent=1 // pred_check
      _
    $region3: #{tpu_custom_call.1} parent=1 // pred_check_branch
      %12 = sbr.rel (0) target = $region5
    $region4: #{tpu_custom_call.1} parent=1 // pred_region
      _
    $region5: #{tpu_custom_call.1} parent=1 // pred_fallthru
      _
    // Predicated region
    $region6: #{tpu_custom_call.1} parent=1 // pred_check
      _
    $region7: #{tpu_custom_call.1} parent=1 // pred_check_branch
      %14 = sbr.rel (0) target = $region9
    $region8: #{tpu_custom_call.1} parent=1 // pred_region
      _
    $region9: #{tpu_custom_call.1} parent=1 // pred_fallthru
      _
    // Predicated region
    $region10: #{tpu_custom_call.1} parent=1 // pred_check
      _
    $region11: #{tpu_custom_call.1} parent=1 // pred_check_branch
      %16 = sbr.rel (0) target = $region13
    $region12: #{tpu_custom_call.1} parent=1 // pred_region
      _
    $region13: #{tpu_custom_call.1} parent=1 // pred_fallthru
      _
    // Predicated region
    $region14: #{tpu_custom_call.1} parent=1 // pred_check
      _
    $region15: #{tpu_custom_call.1} parent=1 // pred_check_branch
      %18 = sbr.rel (0) target = $region17
    $region16: #{tpu_custom_call.1} parent=1 // pred_region
      _
    $region17: #{tpu_custom_call.1} parent=1 // pred_fallthru
      _
    // Predicated region
    $region18: #{tpu_custom_call.1} parent=1 // pred_check
      _
    $region19: #{tpu_custom_call.1} parent=1 // pred_check_branch
      %20 = sbr.rel (0) target = $region21
    $region20: #{tpu_custom_call.1} parent=1 // pred_region
      _
    $region21: #{tpu_custom_call.1} parent=1 // pred_fallthru
      _
    %p21 = scmp.eq.s32.totalorder 0, 0
    // Predicated region
    $region22: #{tpu_custom_call.1} parent=1 // pred_check
      %p22 = pneg %p21
    $region23: #{tpu_custom_call.1} parent=1 // pred_check_branch
      %24 = sbr.rel (%p22) target = $region25
    $region24: #{tpu_custom_call.1} parent=1 // pred_region
      %v25 = vld [vmem:[%s0] sm:$0xff]
      %v26 = vld [vmem:[%s0 + $0x8] sm:$0xff]
      %v27 = vld [vmem:[%s1] sm:$0xff]
      %v28 = vld [vmem:[%s1 + $0x8] sm:$0xff]
      %v29 = vld [vmem:[%s1 + $0x10] sm:$0xff]
      %v30 = vld [vmem:[%s1 + $0x18] sm:$0xff]
      %v31 = vld [vmem:[%s2] sm:$0x7]
      %v32 = vlaneseq
      %v33 = vshrl.u32 %v32, 7
      %v34 = vsub.s32 0, %v33
      %v35 = vrot.slane %v31, %v34
      %vm36 = vcmask 261120
      %v38 = vsel %vm36, %v25, 0
      %v41 = vsel %vm36, %v26, 0
      %v44 = vsel %vm36, %v27, 0
      %v47 = vsel %vm36, %v28, 0
      %v50 = vsel %vm36, %v29, 0
      %v53 = vsel %vm36, %v30, 0
      %55 = vmatprep.subr.mxu0 0.0
      %56 = vmatpush1.xpose.msra.mxu0 %v44
      %57 = vmatprep.subr.mxu0 0.0
      %58 = vmatpush1.xpose.msra.mxu0 %v47
      %59 = vmatprep.subr.mxu0 0.0
      %60 = vmatpush1.xpose.msra.mxu0 %v50
      %61 = vmatprep.subr.mxu0 0.0
      %62 = vmatpush1.xpose.msra.mxu0 %v53
      %63 = vmatprep.subr.mxu0 0.0
      %64 = vmatpush1.xpose.msra.mxu0 0.0
      %65 = vmatprep.subr.mxu0 0.0
      %66 = vmatpush1.xpose.msra.mxu0 0.0
      %67 = vmatprep.subr.mxu0 0.0
      %68 = vmatpush1.xpose.msra.mxu0 0.0
      %69 = vmatprep.subr.mxu0 0.0
      %70 = vmatpush1.xpose.msra.mxu0 0.0
      %71 = vmatprep.subr.mxu0 0.0
      %72 = vmatpush1.xpose.msra.mxu0 0.0
      %73 = vmatprep.subr.mxu0 0.0
      %74 = vmatpush1.xpose.msra.mxu0 0.0
      %75 = vmatprep.subr.mxu0 0.0
      %76 = vmatpush1.xpose.msra.mxu0 0.0
      %77 = vmatprep.subr.mxu0 0.0
      %78 = vmatpush1.xpose.msra.mxu0 0.0
      %79 = vmatprep.subr.mxu0 0.0
      %80 = vmatpush1.xpose.msra.mxu0 0.0
      %81 = vmatprep.subr.mxu0 0.0
      %82 = vmatpush1.xpose.msra.mxu0 0.0
      %83 = vmatprep.subr.mxu0 0.0
      %84 = vmatpush1.xpose.msra.mxu0 0.0
      %85 = vmatprep.subr.mxu0 0.0
      %86 = vmatpush1.xpose.msra.mxu0 0.0
      %87 = vmatprep.subr.mxu0 0.0
      %88 = vmatpush1.xpose.msra.mxu0 0.0
      %89 = vmatprep.subr.mxu0 0.0
      %90 = vmatpush1.xpose.msra.mxu0 0.0
      %91 = vmatprep.subr.mxu0 0.0
      %92 = vmatpush1.xpose.msra.mxu0 0.0
      %93 = vmatprep.subr.mxu0 0.0
      %94 = vmatpush1.xpose.msra.mxu0 0.0
      %95 = vmatprep.subr.mxu0 0.0
      %96 = vmatpush1.xpose.msra.mxu0 0.0
      %97 = vmatprep.subr.mxu0 0.0
      %98 = vmatpush1.xpose.msra.mxu0 0.0
      %99 = vmatprep.subr.mxu0 0.0
      %100 = vmatpush1.xpose.msra.mxu0 0.0
      %101 = vmatprep.subr.mxu0 0.0
      %102 = vmatpush1.xpose.msra.mxu0 0.0
      %103 = vmatprep.subr.mxu0 0.0
      %104 = vmatpush1.xpose.msra.mxu0 0.0
      %105 = vmatprep.subr.mxu0 0.0
      %106 = vmatpush1.xpose.msra.mxu0 0.0
      %107 = vmatprep.subr.mxu0 0.0
      %108 = vmatpush1.xpose.msra.mxu0 0.0
      %109 = vmatprep.subr.mxu0 0.0
      %110 = vmatpush1.xpose.msra.mxu0 0.0
      %111 = vmatprep.subr.mxu0 0.0
      %112 = vmatpush1.xpose.msra.mxu0 0.0
      %113 = vmatprep.subr.mxu0 0.0
      %114 = vmatpush1.xpose.msra.mxu0 0.0
      %115 = vmatprep.subr.mxu0 0.0
      %116 = vmatpush1.xpose.msra.mxu0 0.0
      %117 = vmatprep.subr.mxu0 0.0
      %118 = vmatpush1.xpose.msra.mxu0 0.0
      %119 = vmatprep.mubr.f32.mxu0 0.0
      %120 = vmatmul.mubr.f32.gmra.mrb[0].mxu0 %v38
      %v121 = vpop.f32.mrb[0].mxu0
      %v122 = vadd.f32 %v35, %v121
      %v123 = vpop.f32.mrb[0].mxu0
      %124 = vmatprep.mubr.f32.mxu0 0.0
      %125 = vmatmul.mubr.f32.gmra.mrb[0].mxu0 %v41
      %v126 = vpop.f32.mrb[0].mxu0
      %v127 = vadd.f32 %v35, %v126
      %v128 = vpop.f32.mrb[0].mxu0
      %129 = vdwg.mxu0
      %v130 = vmul.f32 %v122, 0.5
      %v131 = vmul.f32 %v127, 0.5
      %v132 = vmul.f32 %v122, 0.70710677
      %v133 = vmul.f32 %v127, 0.70710677
      %v134 = verf.f32.pop %v132
      %v135 = verf.f32.pop %v133
      %v136 = vadd.f32 %v134, 1.0
      %v137 = vadd.f32 %v135, 1.0
      %v138 = vmul.f32 %v130, %v136
      %v139 = vmul.f32 %v131, %v137
      %v140 = vsel %vm36, %v138, 0.0
      %141 = vadd.xlane.f32.xlu0 %v140
      %v142 = vpop.xlane.xlu0 %141
      %v143 = vsel %vm36, %v139, 0.0
      %144 = vadd.xlane.f32.xlu0 %v143
      %v145 = vpop.xlane.xlu0 %144
      %v146 = vrcp.pop 32.0
      %v147 = vmul.f32 %v142, %v146
      %v148 = vmul.f32 %v145, %v146
      %v149 = vsub.f32 %v138, %v147
      %v150 = vsub.f32 %v139, %v148
      %v151 = vmul.f32 %v149, %v149
      %v152 = vmul.f32 %v150, %v150
      %v153 = vsel %vm36, %v151, 0.0
      %154 = vadd.xlane.f32.xlu0 %v153
      %v155 = vpop.xlane.xlu0 %154
      %v156 = vsel %vm36, %v152, 0.0
      %157 = vadd.xlane.f32.xlu0 %v156
      %v158 = vpop.xlane.xlu0 %157
      %v159 = vmul.f32 %v155, %v146
      %v160 = vmul.f32 %v158, %v146
      %v161 = vadd.f32 %v159, 1e-12
      %v162 = vadd.f32 %v160, 1e-12
      %v163 = vrsqrt.pop %v161
      %v164 = vrsqrt.pop %v162
      %v165 = vmul.f32 %v149, %v163
      %v166 = vmul.f32 %v150, %v164
      %v167 = vlaneseq
      %v168 = vshrl.u32 %v167, 7
      %v169 = vsub.s32 1, %v168
      %v170 = vrot.slane %v31, %v169
      %v171 = vmul.f32 %v165, %v170
      %v172 = vmul.f32 %v166, %v170
      %v173 = vlaneseq
      %v174 = vshrl.u32 %v173, 7
      %v175 = vsub.s32 2, %v174
      %v176 = vrot.slane %v31, %v175
      %v177 = vadd.f32 %v171, %v176
      %v178 = vadd.f32 %v172, %v176
      %179 = vst.msk [vmem:[#allocation2] sm:$0xff] %vm36, %v177
      %180 = vst.msk [vmem:[#allocation2 + $0x8] sm:$0xff] %vm36, %v178
    $region25: #{tpu_custom_call.1} parent=1 // pred_fallthru
      _
    %v181 = vld [vmem:[#allocation2] sm:$0xff]
    %v182 = vld [vmem:[#allocation2 + $0x8] sm:$0xff]
    %v183 = vld [vmem:[%s3] sm:$0xff]
    %v184 = vld [vmem:[%s3 + $0x8] sm:$0xff]
    %v185 = vld [vmem:[%s3 + $0x10] sm:$0xff]
    %v186 = vld [vmem:[%s3 + $0x18] sm:$0xff]
    %v187 = vld [vmem:[%s3 + $0x20] sm:$0xff]
    %v188 = vld [vmem:[%s3 + $0x28] sm:$0xff]
    %v189 = vld [vmem:[%s3 + $0x30] sm:$0xff]
    %v190 = vld [vmem:[%s3 + $0x38] sm:$0xff]
    %v191 = vld [vmem:[%s3 + $0x40] sm:$0xff]
    %v192 = vld [vmem:[%s3 + $0x48] sm:$0xff]
    %v193 = vld [vmem:[%s3 + $0x50] sm:$0xff]
    %v194 = vld [vmem:[%s3 + $0x58] sm:$0xff]
    %v195 = vld [vmem:[%s3 + $0x60] sm:$0xff]
    %v196 = vld [vmem:[%s3 + $0x68] sm:$0xff]
    %v197 = vld [vmem:[%s3 + $0x70] sm:$0xff]
    %v198 = vld [vmem:[%s3 + $0x78] sm:$0xff]
    %v199 = vld [vmem:[%s4] sm:$0x1]
    %v201 = vlaneseq
    %v202 = vshrl.u32 %v201, 7
    %v203 = vsub.s32 0, %v202
    %v204 = vrot.slane %v199, %v203
    %vm206 = vcmask 261120
    %v208 = vsel %vm206, %v181, 0
    %v211 = vsel %vm206, %v182, 0
    %v214 = vsel %vm206, %v183, 0
    %v217 = vsel %vm206, %v184, 0
    %v220 = vsel %vm206, %v185, 0
    %v223 = vsel %vm206, %v186, 0
    %v226 = vsel %vm206, %v187, 0
    %v229 = vsel %vm206, %v188, 0
    %v232 = vsel %vm206, %v189, 0
    %v235 = vsel %vm206, %v190, 0
    %v238 = vsel %vm206, %v191, 0
    %v241 = vsel %vm206, %v192, 0
    %v244 = vsel %vm206, %v193, 0
    %v247 = vsel %vm206, %v194, 0
    %v250 = vsel %vm206, %v195, 0
    %v253 = vsel %vm206, %v196, 0
    %v256 = vsel %vm206, %v197, 0
    %v259 = vsel %vm206, %v198, 0
    %261 = vmatprep.subr.mxu0 0.0
    %262 = vmatpush1.xpose.msra.mxu0 %v214
    %263 = vmatprep.subr.mxu0 0.0
    %264 = vmatpush1.xpose.msra.mxu0 %v217
    %265 = vmatprep.subr.mxu0 0.0
    %266 = vmatpush1.xpose.msra.mxu0 %v220
    %267 = vmatprep.subr.mxu0 0.0
    %268 = vmatpush1.xpose.msra.mxu0 %v223
    %269 = vmatprep.subr.mxu0 0.0
    %270 = vmatpush1.xpose.msra.mxu0 %v226
    %271 = vmatprep.subr.mxu0 0.0
    %272 = vmatpush1.xpose.msra.mxu0 %v229
    %273 = vmatprep.subr.mxu0 0.0
    %274 = vmatpush1.xpose.msra.mxu0 %v232
    %275 = vmatprep.subr.mxu0 0.0
    %276 = vmatpush1.xpose.msra.mxu0 %v235
    %277 = vmatprep.subr.mxu0 0.0
    %278 = vmatpush1.xpose.msra.mxu0 %v238
    %279 = vmatprep.subr.mxu0 0.0
    %280 = vmatpush1.xpose.msra.mxu0 %v241
    %281 = vmatprep.subr.mxu0 0.0
    %282 = vmatpush1.xpose.msra.mxu0 %v244
    %283 = vmatprep.subr.mxu0 0.0
    %284 = vmatpush1.xpose.msra.mxu0 %v247
    %285 = vmatprep.subr.mxu0 0.0
    %286 = vmatpush1.xpose.msra.mxu0 %v250
    %287 = vmatprep.subr.mxu0 0.0
    %288 = vmatpush1.xpose.msra.mxu0 %v253
    %289 = vmatprep.subr.mxu0 0.0
    %290 = vmatpush1.xpose.msra.mxu0 %v256
    %291 = vmatprep.subr.mxu0 0.0
    %292 = vmatpush1.xpose.msra.mxu0 %v259
    %293 = vmatprep.subr.mxu0 0.0
    %294 = vmatpush1.xpose.msra.mxu0 0.0
    %295 = vmatprep.subr.mxu0 0.0
    %296 = vmatpush1.xpose.msra.mxu0 0.0
    %297 = vmatprep.subr.mxu0 0.0
    %298 = vmatpush1.xpose.msra.mxu0 0.0
    %299 = vmatprep.subr.mxu0 0.0
    %300 = vmatpush1.xpose.msra.mxu0 0.0
    %301 = vmatprep.subr.mxu0 0.0
    %302 = vmatpush1.xpose.msra.mxu0 0.0
    %303 = vmatprep.subr.mxu0 0.0
    %304 = vmatpush1.xpose.msra.mxu0 0.0
    %305 = vmatprep.subr.mxu0 0.0
    %306 = vmatpush1.xpose.msra.mxu0 0.0
    %307 = vmatprep.subr.mxu0 0.0
    %308 = vmatpush1.xpose.msra.mxu0 0.0
    %309 = vmatprep.subr.mxu0 0.0
    %310 = vmatpush1.xpose.msra.mxu0 0.0
    %311 = vmatprep.subr.mxu0 0.0
    %312 = vmatpush1.xpose.msra.mxu0 0.0
    %313 = vmatprep.subr.mxu0 0.0
    %314 = vmatpush1.xpose.msra.mxu0 0.0
    %315 = vmatprep.subr.mxu0 0.0
    %316 = vmatpush1.xpose.msra.mxu0 0.0
    %317 = vmatprep.subr.mxu0 0.0
    %318 = vmatpush1.xpose.msra.mxu0 0.0
    %319 = vmatprep.subr.mxu0 0.0
    %320 = vmatpush1.xpose.msra.mxu0 0.0
    %321 = vmatprep.subr.mxu0 0.0
    %322 = vmatpush1.xpose.msra.mxu0 0.0
    %323 = vmatprep.subr.mxu0 0.0
    %324 = vmatpush1.xpose.msra.mxu0 0.0
    %325 = vmatprep.mubr.f32.mxu0 0.0
    %326 = vmatmul.mubr.f32.gmra.mrb[0].mxu0 %v208
    %v327 = vpop.f32.mrb[0].mxu0
    %v328 = vadd.f32 %v204, %v327
    %v329 = vpop.f32.mrb[0].mxu0
    %330 = vmatprep.mubr.f32.mxu0 0.0
    %331 = vmatmul.mubr.f32.gmra.mrb[0].mxu0 %v211
    %v332 = vpop.f32.mrb[0].mxu0
    %v333 = vadd.f32 %v204, %v332
    %v334 = vpop.f32.mrb[0].mxu0
    %335 = vdwg.mxu0
    %336 = vst [vmem:[#allocation3] sm:$0xff] %v328
    %337 = vst [vmem:[#allocation3 + $0x8] sm:$0xff] %v333
    // Predicated region
    $region26: #{tpu_custom_call.1} parent=1 // pred_check
      _
    $region27: #{tpu_custom_call.1} parent=1 // pred_check_branch
      %339 = sbr.rel (0) target = $region29
    $region28: #{tpu_custom_call.1} parent=1 // pred_region
      %s341 = ssub.s32 256, 256
      %342 = vsyncadd [#allocation4], %s341
      %s343 = sshll.u32 [#allocation3], 4
      %s344 = int_to_ptr.vmem [resolvable:$true] %s343
      %349 = dma.vmem_to_hbm [thread:$0]  %s344, 256, %s5, [#allocation4], 128, 128, 8
    $region29: #{tpu_custom_call.1} parent=1 // pred_fallthru
      _
    // Predicated region
    $region30: #{tpu_custom_call.1} parent=1 // pred_check
      _
    $region31: #{tpu_custom_call.1} parent=1 // pred_check_branch
      %351 = sbr.rel (0) target = $region33
    $region32: #{tpu_custom_call.1} parent=1 // pred_region
      %352 = dma.done [#allocation4], 256
    $region33: #{tpu_custom_call.1} parent=1 // pred_fallthru
      _
    %353 = vsyncpa [#allocation4], 1

</llo_original>
